<compile_context>
chip_gen: v6e
topology: v6e:2x2x1
jax: 0.10.0
libtpu: 0.0.40
codegen_flags: <defaults>
</compile_context>

<pallas_src>
import jax
import jax.numpy as jnp
from jax.experimental import pallas as pl
from jax.experimental.pallas import tpu as pltpu


# ----------------------------------------------------------------------------
# Pass 1: global max|W| reduction (tiled, accumulator resident in the output).
# ----------------------------------------------------------------------------
def _weight_scale_kernel(w_ref, max_ref):
    i = pl.program_id(0)
    j = pl.program_id(1)

    @pl.when((i == 0) & (j == 0))
    def _():
        max_ref[...] = jnp.zeros_like(max_ref)

    tile_max = jnp.max(jnp.abs(w_ref[...]))          # scalar reduction (XLU)
    max_ref[...] = jnp.maximum(max_ref[...], tile_max)


# ----------------------------------------------------------------------------
# Pass 2: y = (x @ clip(round(W * inv_s), -127, 127)) * s + b
# ----------------------------------------------------------------------------
def _quantised_matmul_kernel(scale_ref, x_ref, w_ref, b_ref, o_ref, acc_ref):
    k = pl.program_id(2)

    @pl.when(k == 0)
    def _():
        acc_ref[...] = jnp.zeros_like(acc_ref)

    # Integer-valued quantised weight tile (|qi| <= 127); the scale is factored
    # out of this O(tk*tn) elementwise path (one scalar broadcast multiply, no
    # divide, no second (K,N)-sized rescale multiply).
    inv_s = scale_ref[1]
    qi = jnp.clip(jnp.round(w_ref[...] * inv_s), -127.0, 127.0)

    acc_ref[...] += jnp.dot(x_ref[...], qi, preferred_element_type=jnp.float32)

    @pl.when(k == pl.num_programs(2) - 1)
    def _():
        safe_s = scale_ref[0]
        # Scale applied once on the small (tm, tn) accumulator, then bias.
        o_ref[...] = (acc_ref[...] * safe_s + b_ref[...]).astype(o_ref.dtype)


# ----------------------------------------------------------------------------
# Wrapper
# ----------------------------------------------------------------------------
def quantisable_linear(x, w_t, b, *, tm=128, tn=256, tk=512):
    """x: (M, K); w_t: (K, N) [pre-transposed from torch's (N, K)]; b: (1, N)."""
    M, K = x.shape
    Kw, N = w_t.shape
    assert K == Kw and b.shape == (1, N)

    # Clamp tiles to the (small) problem; defaults are 128-aligned and keep
    # double-buffered VMEM use far below the v7x 64 MiB budget.
    tm = min(tm, M)
    tn = min(tn, N)
    tk = min(tk, K)
    assert M % tm == 0 and N % tn == 0 and K % tk == 0, (
        "dims must be multiples of the tile sizes (or smaller than them)")

    # ---- Pass 1: global max|W| (correct under weight tiling). ----
    max_abs = pl.pallas_call(
        _weight_scale_kernel,
        out_shape=jax.ShapeDtypeStruct((1, 1), jnp.float32),
        grid=(K // tk, N // tn),
        in_specs=[
            pl.BlockSpec((tk, tn), lambda i, j: (i, j),
                         memory_space=pltpu.MemorySpace.VMEM),
        ],
        out_specs=pl.BlockSpec((1, 1), lambda i, j: (0, 0),
                               memory_space=pltpu.MemorySpace.VMEM),
        compiler_params=pltpu.CompilerParams(
            dimension_semantics=("arbitrary", "arbitrary")),
        cost_estimate=pl.CostEstimate(
            flops=K * N, transcendentals=0, bytes_accessed=4 * K * N),
    )(w_t)

    # O(1) scalar glue: scale, zero-guard, single exact reciprocal.
    scale = max_abs[0, 0] / 127.0
    safe_scale = jnp.where(scale > 0.0, scale, 1.0)
    scale_params = jnp.stack([safe_scale, 1.0 / safe_scale]).astype(jnp.float32)

    # ---- Pass 2: tiled quantised matmul. ----
    grid = (M // tm, N // tn, K // tk)
    out = pl.pallas_call(
        _quantised_matmul_kernel,
        out_shape=jax.ShapeDtypeStruct((M, N), jnp.float32),
        grid_spec=pltpu.PrefetchScalarGridSpec(
            num_scalar_prefetch=1,                       # scale_params -> SMEM
            grid=grid,
            in_specs=[
                pl.BlockSpec((tm, tk), lambda i, j, k, s: (i, k),
                             memory_space=pltpu.MemorySpace.VMEM),
                pl.BlockSpec((tk, tn), lambda i, j, k, s: (k, j),
                             memory_space=pltpu.MemorySpace.VMEM),
                pl.BlockSpec((1, tn), lambda i, j, k, s: (0, j),
                             memory_space=pltpu.MemorySpace.VMEM),
            ],
            out_specs=pl.BlockSpec((tm, tn), lambda i, j, k, s: (i, j),
                                   memory_space=pltpu.MemorySpace.VMEM),
            scratch_shapes=[pltpu.VMEM((tm, tn), jnp.float32)],
        ),
        compiler_params=pltpu.CompilerParams(
            # M/N independent -> megacore-shardable on v7x; K is the reduction.
            dimension_semantics=("parallel", "parallel", "arbitrary")),
        cost_estimate=pl.CostEstimate(
            flops=2 * M * K * N,
            transcendentals=0,
            bytes_accessed=4 * (M * K + K * N + N + M * N)),
    )(scale_params, x, w_t, b)
    return out


# ----------------------------------------------------------------------------
# Pure-JAX reference of Quantisable(nn.Linear).forward with int8 fake-quant.
# ----------------------------------------------------------------------------
def _reference(x, w_t, b):
    max_abs = jnp.max(jnp.abs(w_t))
    scale = max_abs / 127.0
    safe_scale = jnp.where(scale > 0.0, scale, 1.0)
    inv = 1.0 / safe_scale
    q = jnp.clip(jnp.round(w_t * inv), -127.0, 127.0) * safe_scale
    q = jnp.where(scale > 0.0, q, w_t)
    return jnp.dot(x, q, precision=jax.lax.Precision.HIGHEST) + b


if __name__ == "__main__":
    # Shapes implied by wrapping nn.Linear(32, 128): seq=8, in=32, out=128.
    M, K, N = 8, 32, 128

    key = jax.random.PRNGKey(0)
    kx, kw, kb = jax.random.split(key, 3)

    x = jax.random.normal(kx, (M, K), dtype=jnp.float32)
    # torch Linear stores W as (N, K); this is the "full-precision backup".
    w_torch_layout = jax.random.normal(kw, (N, K), dtype=jnp.float32) * 0.1
    b = jax.random.normal(kb, (1, N), dtype=jnp.float32) * 0.01

    # Glue: pre-transpose to (K, N) so the kernel runs a plain x @ W matmul.
    w_t = jnp.transpose(w_torch_layout)

    fwd = jax.jit(quantisable_linear)   # one dispatch for both passes + glue
    out = jax.block_until_ready(fwd(x, w_t, b))

    ref = _reference(x, w_t, b)
    assert out.shape == (M, N)
    assert jnp.allclose(out, ref, atol=1e-4, rtol=1e-4), "mismatch vs reference"

    print("KERNEL_OK")
</pallas_src>

<mosaic_0001>
module attributes {stable_mosaic.version = 11 : i64} {
  func.func @_quantised_matmul_kernel(%arg0: i32, %arg1: i32, %arg2: i32, %arg3: memref<2xf32, #tpu.memory_space<smem>>, %arg4: memref<8x32xf32, #tpu.memory_space<vmem>>, %arg5: memref<32x128xf32, #tpu.memory_space<vmem>>, %arg6: memref<1x128xf32, #tpu.memory_space<vmem>>, %arg7: memref<8x128xf32, #tpu.memory_space<vmem>>, %arg8: memref<8x128xf32, #tpu.memory_space<vmem>>) attributes {dimension_semantics = [#tpu.dimension_semantics<parallel>, #tpu.dimension_semantics<parallel>, #tpu.dimension_semantics<arbitrary>], iteration_bounds = array<i64: 1, 1, 1>, scalar_prefetch = 1 : i64, scratch_operands = 1 : i64, tpu.core_type = #tpu.core_type<tc>, window_params = [{transform_indices = @transform_0, window_bounds = array<i64: 8, 32>}, {transform_indices = @transform_1, window_bounds = array<i64: 32, 128>}, {transform_indices = @transform_2, window_bounds = array<i64: 1, 128>}, {transform_indices = @transform_3, window_bounds = array<i64: 8, 128>}]} {
    %c0_i32 = arith.constant 0 : i32
    %0 = arith.cmpi eq, %arg2, %c0_i32 : i32
    %1 = arith.extui %0 : i1 to i32
    %c0_i32_0 = arith.constant 0 : i32
    %2 = arith.cmpi ne, %1, %c0_i32_0 : i32
    scf.if %2 {
      %cst_12 = arith.constant 0.000000e+00 : f32
      %20 = vector.broadcast %cst_12 : f32 to vector<8x128xf32>
      %c0_13 = arith.constant 0 : index
      %c0_14 = arith.constant 0 : index
      %21 = vector.load %arg8[%c0_13, %c0_14] : memref<8x128xf32, #tpu.memory_space<vmem>>, vector<8x128xf32>
      tpu.vector_store %arg8[%c0_13, %c0_14], %20 {strides = array<i32>} : memref<8x128xf32, #tpu.memory_space<vmem>>, vector<8x128xf32>,
    } else {
    }
    %c1 = arith.constant 1 : index
    %3 = memref.load %arg3[%c1] : memref<2xf32, #tpu.memory_space<smem>>
    %c0 = arith.constant 0 : index
    %c0_1 = arith.constant 0 : index
    %4 = vector.load %arg5[%c0, %c0_1] : memref<32x128xf32, #tpu.memory_space<vmem>>, vector<32x128xf32>
    %5 = vector.broadcast %3 : f32 to vector<32x128xf32>
    %6 = arith.mulf %4, %5 : vector<32x128xf32>
    %7 = math.roundeven %6 : vector<32x128xf32>
    %cst = arith.constant -1.270000e+02 : f32
    %cst_2 = arith.constant 1.270000e+02 : f32
    %8 = vector.broadcast %cst : f32 to vector<32x128xf32>
    %9 = arith.maximumf %8, %7 : vector<32x128xf32>
    %10 = vector.broadcast %cst_2 : f32 to vector<32x128xf32>
    %11 = arith.minimumf %10, %9 : vector<32x128xf32>
    %c0_3 = arith.constant 0 : index
    %c0_4 = arith.constant 0 : index
    %12 = vector.load %arg8[%c0_3, %c0_4] : memref<8x128xf32, #tpu.memory_space<vmem>>, vector<8x128xf32>
    %c0_5 = arith.constant 0 : index
    %c0_6 = arith.constant 0 : index
    %13 = vector.load %arg4[%c0_5, %c0_6] : memref<8x32xf32, #tpu.memory_space<vmem>>, vector<8x32xf32>
    %cst_7 = arith.constant dense<0.000000e+00> : vector<8x128xf32>
    %14 = tpu.matmul %13, %11, %cst_7 {dimension_numbers = #tpu.dot_dimension_numbers<[1], [0], [0], [1], [0, 0, 1, 1], [], []>} : vector<8x32xf32>, vector<32x128xf32>, vector<8x128xf32> -> vector<8x128xf32>
    %15 = arith.addf %12, %14 : vector<8x128xf32>
    %c0_8 = arith.constant 0 : index
    %c0_9 = arith.constant 0 : index
    %16 = vector.load %arg8[%c0_8, %c0_9] : memref<8x128xf32, #tpu.memory_space<vmem>>, vector<8x128xf32>
    tpu.vector_store %arg8[%c0_8, %c0_9], %15 {strides = array<i32>} : memref<8x128xf32, #tpu.memory_space<vmem>>, vector<8x128xf32>,
    %c0_i32_10 = arith.constant 0 : i32
    %17 = arith.cmpi eq, %arg2, %c0_i32_10 : i32
    %18 = arith.extui %17 : i1 to i32
    %c0_i32_11 = arith.constant 0 : i32
    %19 = arith.cmpi ne, %18, %c0_i32_11 : i32
    scf.if %19 {
      %c0_12 = arith.constant 0 : index
      %20 = memref.load %arg3[%c0_12] : memref<2xf32, #tpu.memory_space<smem>>
      %c0_13 = arith.constant 0 : index
      %c0_14 = arith.constant 0 : index
      %21 = vector.load %arg8[%c0_13, %c0_14] : memref<8x128xf32, #tpu.memory_space<vmem>>, vector<8x128xf32>
      %22 = vector.broadcast %20 : f32 to vector<8x128xf32>
      %23 = arith.mulf %21, %22 : vector<8x128xf32>
      %c0_15 = arith.constant 0 : index
      %c0_16 = arith.constant 0 : index
      %24 = vector.load %arg6[%c0_15, %c0_16] : memref<1x128xf32, #tpu.memory_space<vmem>>, vector<1x128xf32>
      %25 = vector.broadcast %24 : vector<1x128xf32> to vector<8x128xf32>
      %26 = arith.addf %23, %25 : vector<8x128xf32>
      %c0_17 = arith.constant 0 : index
      %c0_18 = arith.constant 0 : index
      %27 = vector.load %arg7[%c0_17, %c0_18] : memref<8x128xf32, #tpu.memory_space<vmem>>, vector<8x128xf32>
      tpu.vector_store %arg7[%c0_17, %c0_18], %26 {strides = array<i32>} : memref<8x128xf32, #tpu.memory_space<vmem>>, vector<8x128xf32>,
    } else {
    }
    return
  }
  func.func @transform_0(%arg0: i32, %arg1: i32, %arg2: i32, %arg3: memref<2xf32, #tpu.memory_space<smem>>) -> (i32, i32) {
    %c0_i32 = arith.constant 0 : i32
    return %arg0, %arg2 : i32, i32
  }
  func.func @transform_1(%arg0: i32, %arg1: i32, %arg2: i32, %arg3: memref<2xf32, #tpu.memory_space<smem>>) -> (i32, i32) {
    %c0_i32 = arith.constant 0 : i32
    return %arg2, %arg1 : i32, i32
  }
  func.func @transform_2(%arg0: i32, %arg1: i32, %arg2: i32, %arg3: memref<2xf32, #tpu.memory_space<smem>>) -> (i32, i32) {
    %c0_i32 = arith.constant 0 : i32
    %c0_i32_0 = arith.constant 0 : i32
    return %c0_i32, %arg1 : i32, i32
  }
  func.func @transform_3(%arg0: i32, %arg1: i32, %arg2: i32, %arg3: memref<2xf32, #tpu.memory_space<smem>>) -> (i32, i32) {
    %c0_i32 = arith.constant 0 : i32
    return %arg0, %arg1 : i32, i32
  }
}

module attributes {stable_mosaic.version = 11 : i64} {
  func.func @_weight_scale_kernel(%arg0: i32, %arg1: i32, %arg2: memref<32x128xf32, #tpu.memory_space<vmem>>, %arg3: memref<1x1xf32, #tpu.memory_space<vmem>>) attributes {dimension_semantics = [#tpu.dimension_semantics<arbitrary>, #tpu.dimension_semantics<arbitrary>], iteration_bounds = array<i64: 1, 1>, scalar_prefetch = 0 : i64, scratch_operands = 0 : i64, tpu.core_type = #tpu.core_type<tc>, window_params = [{transform_indices = @transform_0, window_bounds = array<i64: 32, 128>}, {pipeline_mode = #tpu.pipeline_mode<synchronous>, transform_indices = @transform_1, window_bounds = array<i64: 1, 1>}]} {
    %c0_i32 = arith.constant 0 : i32
    %0 = arith.cmpi eq, %arg0, %c0_i32 : i32
    %c0_i32_0 = arith.constant 0 : i32
    %1 = arith.cmpi eq, %arg1, %c0_i32_0 : i32
    %2 = arith.andi %0, %1 : i1
    %3 = arith.extui %2 : i1 to i32
    %c0_i32_1 = arith.constant 0 : i32
    %4 = arith.cmpi ne, %3, %c0_i32_1 : i32
    scf.if %4 {
      %cst_7 = arith.constant 0.000000e+00 : f32
      %15 = vector.broadcast %cst_7 : f32 to vector<1x1xf32>
      %c0_8 = arith.constant 0 : index
      %c0_9 = arith.constant 0 : index
      %16 = vector.load %arg3[%c0_8, %c0_9] : memref<1x1xf32, #tpu.memory_space<vmem>>, vector<1x1xf32>
      tpu.vector_store %arg3[%c0_8, %c0_9], %15 {strides = array<i32>} : memref<1x1xf32, #tpu.memory_space<vmem>>, vector<1x1xf32>,
    } else {
    }
    %c0 = arith.constant 0 : index
    %c0_2 = arith.constant 0 : index
    %5 = vector.load %arg2[%c0, %c0_2] : memref<32x128xf32, #tpu.memory_space<vmem>>, vector<32x128xf32>
    %6 = math.absf %5 : vector<32x128xf32>
    %7 = vector.shape_cast %6 : vector<32x128xf32> to vector<1x32x128xf32>
    %cst = arith.constant dense<0xFF800000> : vector<1xf32>
    %8 = vector.multi_reduction <maximumf>, %7, %cst [1, 2] : vector<1x32x128xf32> to vector<1xf32>
    %9 = vector.shape_cast %8 : vector<1xf32> to vector<1x1x1xf32>
    %10 = vector.extract %9[0, 0, 0] : f32 from vector<1x1x1xf32>
    %c0_3 = arith.constant 0 : index
    %c0_4 = arith.constant 0 : index
    %11 = vector.load %arg3[%c0_3, %c0_4] : memref<1x1xf32, #tpu.memory_space<vmem>>, vector<1x1xf32>
    %12 = vector.broadcast %10 : f32 to vector<1x1xf32>
    %13 = arith.maximumf %11, %12 : vector<1x1xf32>
    %c0_5 = arith.constant 0 : index
    %c0_6 = arith.constant 0 : index
    %14 = vector.load %arg3[%c0_5, %c0_6] : memref<1x1xf32, #tpu.memory_space<vmem>>, vector<1x1xf32>
    tpu.vector_store %arg3[%c0_5, %c0_6], %13 {strides = array<i32>} : memref<1x1xf32, #tpu.memory_space<vmem>>, vector<1x1xf32>,
    return
  }
  func.func @transform_0(%arg0: i32, %arg1: i32) -> (i32, i32) {
    %c0_i32 = arith.constant 0 : i32
    return %arg0, %arg1 : i32, i32
  }
  func.func @transform_1(%arg0: i32, %arg1: i32) -> (i32, i32) {
    %c0_i32 = arith.constant 0 : i32
    %c0_i32_0 = arith.constant 0 : i32
    %c0_i32_1 = arith.constant 0 : i32
    return %c0_i32, %c0_i32_0 : i32, i32
  }
}

</mosaic_0001>

<llo_original>
// kernel: quantisable_linear.2
$region0: #{quantisable_linear.2}
  #allocation0 [shape = 'u32[]', space=smem, size = 0x4, offset = 0x4, fixed_abs, tag = 'smem constant byte address 0x4 - core index']
  #allocation1 [shape = 'u32[144,128]{1,0:T(1,128)}', space=vmem, size = 0x12000, scoped, tag = 'internal scratch']
  %s0 = inlined_call_operand.hbm [shape: f32[32,128], index: 0, kind: input, shape index: {}]
  %s1 = inlined_call_operand.hbm [shape: f32[1,1], index: 1, kind: output, shape index: {}]
  %s2 = sld [smem:[#allocation0]]
  $region22: #{quantisable_linear.2} parent=0
    _
  %s4 = ssub.s32 1, %s2
  %s5 = scalar_select 0, %s4, %s2
  $region1: #{quantisable_linear.2} parent=0
    #allocation2 [shape = 'u8[16384]{0}', space=vmem, size = 0x4000, scoped, tag = 'input window, operand 0, single buffered']
    #allocation3 [shape = 's32[1]{0}', space=sflag, size = 0x4, scoped, tag = 'scoped memory for quantisable_linear.2']
    #allocation4 [shape = 's32[1]{0}', space=sflag, size = 0x4, scoped, tag = 'scoped memory for quantisable_linear.2']
    #allocation5 [shape = 'u8[512]{0}', space=vmem, size = 0x400, scoped, tag = 'output window, operand 0, single buffered']
    %6 = vsyncpa [#allocation3], 0
    %7 = vsyncpa [#allocation4], 0
    // Predicated region
    $region2: #{quantisable_linear.2} parent=1 // pred_check
      _
    $region3: #{quantisable_linear.2} parent=1 // pred_check_branch
      %9 = sbr.rel (0) target = $region5
    $region4: #{quantisable_linear.2} parent=1 // pred_region
      %s11 = ssub.s32 512, 512
      %12 = vsyncadd [#allocation3], %s11
      %s13 = sshll.u32 [#allocation2], 4
      %s14 = int_to_ptr.vmem [resolvable:$true] %s13
      %19 = dma.hbm_to_vmem [thread:$0]  %s0, 512, %s14, [#allocation3], 128, 128, 8
    $region5: #{quantisable_linear.2} parent=1 // pred_fallthru
      _
    // Predicated region
    $region6: #{quantisable_linear.2} parent=1 // pred_check
      _
    $region7: #{quantisable_linear.2} parent=1 // pred_check_branch
      %21 = sbr.rel (0) target = $region9
    $region8: #{quantisable_linear.2} parent=1 // pred_region
      %22 = dma.done [#allocation3], 512
    $region9: #{quantisable_linear.2} parent=1 // pred_fallthru
      _
    %p23 = scmp.eq.s32.totalorder 0, 0
    %p24 = scmp.eq.s32.totalorder 0, 0
    %p25 = pnand %p23, %p24
    %p26 = pneg %p25
    // Predicated region
    $region10: #{quantisable_linear.2} parent=1 // pred_check
      _
    $region11: #{quantisable_linear.2} parent=1 // pred_check_branch
      %28 = sbr.rel (%p25) target = $region13
    $region12: #{quantisable_linear.2} parent=1 // pred_region
      %vm29 = vcmask 0
      %30 = vst.msk [vmem:[#allocation5] sm:$0x1] %vm29, 0.0
    $region13: #{quantisable_linear.2} parent=1 // pred_fallthru
      _
    %v31 = vld [vmem:[#allocation2] sm:$0xff]
    %v32 = vld [vmem:[#allocation2 + $0x8] sm:$0xff]
    %v33 = vld [vmem:[#allocation2 + $0x10] sm:$0xff]
    %v34 = vld [vmem:[#allocation2 + $0x18] sm:$0xff]
    %v35 = vand.u32 2147483647, %v31
    %v36 = vand.u32 2147483647, %v32
    %v37 = vand.u32 2147483647, %v33
    %v38 = vand.u32 2147483647, %v34
    %v39 = vmax.f32 %v35, %v36
    %v40 = vmax.f32 %v37, %v38
    %v41 = vmax.f32 %v39, %v40
    %42 = vmax.xlane.f32.xlu0 %v41
    %v43 = vpop.xlane.xlu0 %42
    %v44 = vrot.slane %v43, 4
    %v45 = vmax.f32 %v43, %v44
    %v46 = vrot.slane %v45, 2
    %v47 = vmax.f32 %v45, %v46
    %v48 = vrot.slane %v47, 1
    %v49 = vmax.f32 %v47, %v48
    %s50 = vtos %v49
    %v51 = vld [vmem:[#allocation5] sm:$0x1]
    %v52 = vstv %s50
    %v53 = vmax.f32 %v51, %v52
    %vm54 = vcmask 0
    %55 = vst.msk [vmem:[#allocation5] sm:$0x1] %vm54, %v53
    // Predicated region
    $region14: #{quantisable_linear.2} parent=1 // pred_check
      _
    $region15: #{quantisable_linear.2} parent=1 // pred_check_branch
      %57 = sbr.rel (0) target = $region17
    $region16: #{quantisable_linear.2} parent=1 // pred_region
      %s59 = ssub.s32 16, 16
      %60 = vsyncadd [#allocation4], %s59
      %s62 = sshll.u32 [#allocation5], 4
      %s63 = int_to_ptr.vmem [resolvable:$true] %s62
      %65 = dma.vmem_to_hbm [thread:$0]  %s63, 16, %s1, [#allocation4]
    $region17: #{quantisable_linear.2} parent=1 // pred_fallthru
      _
    // Predicated region
    $region18: #{quantisable_linear.2} parent=1 // pred_check
      _
    $region19: #{quantisable_linear.2} parent=1 // pred_check_branch
      %67 = sbr.rel (0) target = $region21
    $region20: #{quantisable_linear.2} parent=1 // pred_region
      %68 = dma.done [#allocation4], 16
    $region21: #{quantisable_linear.2} parent=1 // pred_fallthru
      _
    %69 = vsyncpa [#allocation3], 1
    %70 = vsyncpa [#allocation4], 1

// kernel: quantisable_linear.3
$region0: #{quantisable_linear.3}
  #allocation0 [shape = 'u32[]', space=smem, size = 0x4, offset = 0x4, fixed_abs, tag = 'smem constant byte address 0x4 - core index']
  #allocation1 [shape = 'u32[144,128]{1,0:T(1,128)}', space=vmem, size = 0x12000, scoped, tag = 'internal scratch']
  #allocation2 [shape = 'f32[8,128]{1,0:T(8,128)}', space=vmem, size = 0x1000, scoped, tag = 'scratch operand']
  #allocation3 [shape = 's32[1]{0}', space=sflag, size = 0x4, scoped, tag = 'scoped memory for quantisable_linear.3']
  #allocation4 [shape = 'u8[512]{0}', space=smem, size = 0x200, scoped, tag = 'prefetched SMEM operand 0']
  %s0 = inlined_call_operand.vmem [shape: f32[2], index: 0, kind: input, shape index: {}]
  %s1 = inlined_call_operand.vmem [shape: f32[8,32], index: 1, kind: input, shape index: {}]
  %s2 = inlined_call_operand.vmem [shape: f32[32,128], index: 2, kind: input, shape index: {}]
  %s3 = inlined_call_operand.vmem [shape: f32[1,128], index: 3, kind: input, shape index: {}]
  %s4 = inlined_call_operand.hbm [shape: f32[8,128], index: 4, kind: output, shape index: {}]
  %s5 = sld [smem:[#allocation0]]
  $region30: #{quantisable_linear.3} parent=0
    _
  %s7 = ssub.s32 1, %s5
  %s8 = scalar_select 0, %s7, %s5
  %s9 = sshll.u32 %s0, 4
  %s10 = int_to_ptr.vmem [resolvable:$true] %s9
  %12 = dma.vmem_to_smem %s10, 16, [#allocation4], [#allocation3]
  %13 = dma.done [#allocation3], 16
  %14 = sfence
  $region1: #{quantisable_linear.3} parent=0
    #allocation5 [shape = 'u8[4096]{0}', space=vmem, size = 0x1000, scoped, tag = 'output window, operand 0, single buffered']
    #allocation6 [shape = 's32[1]{0}', space=sflag, size = 0x4, scoped, tag = 'scoped memory for quantisable_linear.3']
    %15 = vsyncpa [#allocation6], 0
    // Predicated region
    $region2: #{quantisable_linear.3} parent=1 // pred_check
      _
    $region3: #{quantisable_linear.3} parent=1 // pred_check_branch
      %17 = sbr.rel (0) target = $region5
    $region4: #{quantisable_linear.3} parent=1 // pred_region
      _
    $region5: #{quantisable_linear.3} parent=1 // pred_fallthru
      _
    // Predicated region
    $region6: #{quantisable_linear.3} parent=1 // pred_check
      _
    $region7: #{quantisable_linear.3} parent=1 // pred_check_branch
      %19 = sbr.rel (0) target = $region9
    $region8: #{quantisable_linear.3} parent=1 // pred_region
      _
    $region9: #{quantisable_linear.3} parent=1 // pred_fallthru
      _
    // Predicated region
    $region10: #{quantisable_linear.3} parent=1 // pred_check
      _
    $region11: #{quantisable_linear.3} parent=1 // pred_check_branch
      %21 = sbr.rel (0) target = $region13
    $region12: #{quantisable_linear.3} parent=1 // pred_region
      _
    $region13: #{quantisable_linear.3} parent=1 // pred_fallthru
      _
    %p22 = scmp.eq.s32.totalorder 0, 0
    // Predicated region
    $region14: #{quantisable_linear.3} parent=1 // pred_check
      %p23 = pneg %p22
    $region15: #{quantisable_linear.3} parent=1 // pred_check_branch
      %25 = sbr.rel (%p23) target = $region17
    $region16: #{quantisable_linear.3} parent=1 // pred_region
      %26 = vst [vmem:[#allocation2] sm:$0xff] 0.0
    $region17: #{quantisable_linear.3} parent=1 // pred_fallthru
      _
    %s27 = sld [smem:[#allocation4 + $0x1]]
    %v28 = vld [vmem:[%s2] sm:$0xff]
    %v29 = vld [vmem:[%s2 + $0x8] sm:$0xff]
    %v30 = vld [vmem:[%s2 + $0x10] sm:$0xff]
    %v31 = vld [vmem:[%s2 + $0x18] sm:$0xff]
    %v32 = vstv %s27
    %v33 = vmul.f32 %v28, %v32
    %v34 = vmul.f32 %v29, %v32
    %v35 = vmul.f32 %v30, %v32
    %v36 = vmul.f32 %v31, %v32
    %v37 = vround.ne.pseudo %v33
    %v38 = vround.ne.pseudo %v34
    %v39 = vround.ne.pseudo %v35
    %v40 = vround.ne.pseudo %v36
    %v41 = vmax.f32 %v37, -127.0
    %v42 = vmax.f32 %v38, -127.0
    %v43 = vmax.f32 %v39, -127.0
    %v44 = vmax.f32 %v40, -127.0
    %v45 = vmin.f32 %v41, 127.0
    %v46 = vmin.f32 %v42, 127.0
    %v47 = vmin.f32 %v43, 127.0
    %v48 = vmin.f32 %v44, 127.0
    %v49 = vld [vmem:[#allocation2] sm:$0xff]
    %v50 = vld [vmem:[%s1] sm:$0xff]
    %vm51 = vcmask 261120
    %v53 = vsel %vm51, %v50, 0
    %55 = vmatprep.subr.mxu0 0.0
    %56 = vmatpush1.msra.mxu0 0.0
    %57 = vmatprep.subr.mxu0 0.0
    %58 = vmatpush1.msra.mxu0 0.0
    %59 = vmatprep.subr.mxu0 0.0
    %60 = vmatpush1.msra.mxu0 0.0
    %61 = vmatprep.subr.mxu0 0.0
    %62 = vmatpush1.msra.mxu0 0.0
    %63 = vmatprep.subr.mxu0 0.0
    %64 = vmatpush1.msra.mxu0 0.0
    %65 = vmatprep.subr.mxu0 0.0
    %66 = vmatpush1.msra.mxu0 0.0
    %67 = vmatprep.subr.mxu0 0.0
    %68 = vmatpush1.msra.mxu0 0.0
    %69 = vmatprep.subr.mxu0 0.0
    %70 = vmatpush1.msra.mxu0 0.0
    %71 = vmatprep.subr.mxu0 0.0
    %72 = vmatpush1.msra.mxu0 0.0
    %73 = vmatprep.subr.mxu0 0.0
    %74 = vmatpush1.msra.mxu0 0.0
    %75 = vmatprep.subr.mxu0 0.0
    %76 = vmatpush1.msra.mxu0 0.0
    %77 = vmatprep.subr.mxu0 0.0
    %78 = vmatpush1.msra.mxu0 0.0
    %79 = vmatprep.subr.mxu0 0.0
    %80 = vmatpush1.msra.mxu0 %v48
    %81 = vmatprep.subr.mxu0 0.0
    %82 = vmatpush1.msra.mxu0 %v47
    %83 = vmatprep.subr.mxu0 0.0
    %84 = vmatpush1.msra.mxu0 %v46
    %85 = vmatprep.subr.mxu0 0.0
    %86 = vmatpush1.msra.mxu0 %v45
    %87 = vmatprep.subr.mxu0 0.0
    %88 = vmatpush2.msra.mxu0 0.0
    %89 = vmatprep.subr.mxu0 0.0
    %90 = vmatpush2.msra.mxu0 0.0
    %91 = vmatprep.subr.mxu0 0.0
    %92 = vmatpush2.msra.mxu0 0.0
    %93 = vmatprep.subr.mxu0 0.0
    %94 = vmatpush2.msra.mxu0 0.0
    %95 = vmatprep.subr.mxu0 0.0
    %96 = vmatpush2.msra.mxu0 0.0
    %97 = vmatprep.subr.mxu0 0.0
    %98 = vmatpush2.msra.mxu0 0.0
    %99 = vmatprep.subr.mxu0 0.0
    %100 = vmatpush2.msra.mxu0 0.0
    %101 = vmatprep.subr.mxu0 0.0
    %102 = vmatpush2.msra.mxu0 0.0
    %103 = vmatprep.subr.mxu0 0.0
    %104 = vmatpush2.msra.mxu0 0.0
    %105 = vmatprep.subr.mxu0 0.0
    %106 = vmatpush2.msra.mxu0 0.0
    %107 = vmatprep.subr.mxu0 0.0
    %108 = vmatpush2.msra.mxu0 0.0
    %109 = vmatprep.subr.mxu0 0.0
    %110 = vmatpush2.msra.mxu0 0.0
    %111 = vmatprep.subr.mxu0 0.0
    %112 = vmatpush2.msra.mxu0 0.0
    %113 = vmatprep.subr.mxu0 0.0
    %114 = vmatpush2.msra.mxu0 0.0
    %115 = vmatprep.subr.mxu0 0.0
    %116 = vmatpush2.msra.mxu0 0.0
    %117 = vmatprep.subr.mxu0 0.0
    %118 = vmatpush2.msra.mxu0 0.0
    %119 = vmatprep.mubr.f32.mxu0 0.0
    %120 = vmatmul.mubr.f32.gmra.mxu0 %v53
    %v121 = vpop.f32.mrf.mxu0
    %v122 = vadd.f32 0.0, %v121
    %v123 = vpop.f32.mrf.mxu0
    %124 = vdwg.mxu0
    %v125 = vadd.f32 %v49, %v122
    %126 = vst [vmem:[#allocation2] sm:$0xff] %v125
    // Predicated region
    $region18: #{quantisable_linear.3} parent=1 // pred_check
      %p127 = pneg %p22
    $region19: #{quantisable_linear.3} parent=1 // pred_check_branch
      %129 = sbr.rel (%p127) target = $region21
    $region20: #{quantisable_linear.3} parent=1 // pred_region
      %s130 = sld [smem:[#allocation4]]
      %v131 = vld [vmem:[#allocation2] sm:$0xff]
      %v132 = vstv %s130
      %v133 = vmul.f32 %v131, %v132
      %v134 = vld [vmem:[%s3] sm:$0x1]
      %v136 = vlaneseq
      %v137 = vshrl.u32 %v136, 7
      %v138 = vsub.s32 0, %v137
      %v139 = vrot.slane %v134, %v138
      %v141 = vadd.f32 %v133, %v139
      %142 = vst [vmem:[#allocation5] sm:$0xff] %v141
    $region21: #{quantisable_linear.3} parent=1 // pred_fallthru
      _
    // Predicated region
    $region22: #{quantisable_linear.3} parent=1 // pred_check
      _
    $region23: #{quantisable_linear.3} parent=1 // pred_check_branch
      %144 = sbr.rel (0) target = $region25
    $region24: #{quantisable_linear.3} parent=1 // pred_region
      %s146 = ssub.s32 128, 128
      %147 = vsyncadd [#allocation6], %s146
      %s149 = sshll.u32 [#allocation5], 4
      %s150 = int_to_ptr.vmem [resolvable:$true] %s149
      %152 = dma.vmem_to_hbm [thread:$0]  %s150, 128, %s4, [#allocation6]
    $region25: #{quantisable_linear.3} parent=1 // pred_fallthru
      _
    // Predicated region
    $region26: #{quantisable_linear.3} parent=1 // pred_check
      _
    $region27: #{quantisable_linear.3} parent=1 // pred_check_branch
      %154 = sbr.rel (0) target = $region29
    $region28: #{quantisable_linear.3} parent=1 // pred_region
      %155 = dma.done [#allocation6], 128
    $region29: #{quantisable_linear.3} parent=1 // pred_fallthru
      _
    %156 = vsyncpa [#allocation6], 1

</llo_original>
